<compile_context>
chip_gen: v7x
topology: tpu7x:2x2x1
jax: 0.10.0
libtpu: 0.0.40
codegen_flags: <defaults>
</compile_context>

<pallas_src>
import functools

import jax
import jax.numpy as jnp
from jax.experimental import pallas as pl
from jax.experimental.pallas import tpu as pltpu


_LANES = 128
_ROW_ALIGN = 32            # covers f32 (8), bf16 (16), int8/fp8 (32) sublane packing
_TARGET_BLOCK_ROWS = 16384  # 8 MiB per f32 block (16 MiB double-buffered)
_MIN_BLOCK_ROWS = 1024      # never let blocks collapse toward (8,128)
_MIN_BLOCKS = 4             # keep both v7x TensorCores fed + pipeline primed
_XLA_FAST_PATH_NUMEL = 128 * 1024   # below this, Pallas launch overhead dominates
_VMEM_LIMIT_BYTES = 32 * 1024 * 1024


# ----------------------------------------------------------------------------
# Pallas kernel: per-block sigmoid mask + (8, 128) partial reduction
# ----------------------------------------------------------------------------
def _sigmoid_partial_sum_kernel(p_ref, out_ref, *, total_rows, block_rows,
                                needs_mask):
    # p_ref: (block_rows, 128) in the param dtype; out_ref: (1, 8, 128) f32.
    x = p_ref[...].astype(jnp.float32)
    # TODO(synk): _compute_mask is abstract in the torch base class; the
    # continuous sigmoid mask is the canonical concrete realization.
    # Single-transcendental formulation: sigmoid(x) = 0.5*tanh(0.5*x) + 0.5
    # (one EUP op per element; mul/add run on the VPU under the DMA).
    mask = 0.5 * jnp.tanh(0.5 * x) + 0.5

    if needs_mask:
        # Partial last block: zero out rows beyond the real extent.  The
        # out-of-bounds VMEM content is undefined; jnp.where discards it.
        i = pl.program_id(0)
        valid_rows = total_rows - i * block_rows
        row_idx = jax.lax.broadcasted_iota(jnp.int32, (block_rows, _LANES), 0)
        mask = jnp.where(row_idx < valid_rows, mask, 0.0)

    # (block_rows, 128) -> (block_rows//8, 8, 128); reduce the leading
    # (non-layout) axis with pure VPU adds -> one full (8,128) vreg partial.
    partial = jnp.sum(mask.reshape(block_rows // 8, 8, _LANES), axis=0)
    out_ref[0] = partial


def _round_up(x: int, m: int) -> int:
    return ((x + m - 1) // m) * m


def _choose_block_rows(rows: int) -> int:
    """Fixed large tiles: clamp(rows/4 rounded to 32, [1024, 16384])."""
    target = _round_up(-(-rows // _MIN_BLOCKS), _ROW_ALIGN)
    return max(_MIN_BLOCK_ROWS, min(_TARGET_BLOCK_ROWS, target))


def sigmoid_mask_sum(params: jax.Array) -> jax.Array:
    """sum(sigmoid(params)) with the element-wise mask fused into a Pallas kernel."""
    n = int(params.size)
    if n == 0:
        return jnp.zeros((), jnp.float32)

    flat = params.reshape(-1)

    # Small-input fast path: Pallas launch + pipeline warm-up would dwarf the
    # compute for tiny mask layers.
    if n < _XLA_FAST_PATH_NUMEL:
        return jnp.sum(jax.nn.sigmoid(flat.astype(jnp.float32)))

    # Ragged tail (< 128 elems): sum in XLA; Pallas runs on the lane-aligned
    # prefix.  (No full-array pad copy — the kernel is purely HBM-bound.)
    tail = n % _LANES
    tail_sum = None
    if tail:
        tail_sum = jnp.sum(jax.nn.sigmoid(flat[n - tail:].astype(jnp.float32)))
        flat = flat[: n - tail]

    rows = (n - tail) // _LANES
    p2d = flat.reshape(rows, _LANES)   # free for contiguous row-major data

    block_rows = _choose_block_rows(rows)
    n_blocks = -(-rows // block_rows)
    needs_mask = (rows % block_rows) != 0

    kernel = functools.partial(
        _sigmoid_partial_sum_kernel,
        total_rows=rows, block_rows=block_rows, needs_mask=needs_mask)

    n_elems = rows * _LANES
    cost = pl.CostEstimate(
        flops=5 * n_elems,
        transcendentals=n_elems,
        bytes_accessed=n_elems * p2d.dtype.itemsize + n_blocks * 8 * _LANES * 4,
    )

    partials = pl.pallas_call(
        kernel,
        out_shape=jax.ShapeDtypeStruct((n_blocks, 8, _LANES), jnp.float32),
        grid_spec=pltpu.PrefetchScalarGridSpec(
            num_scalar_prefetch=0,
            grid=(n_blocks,),
            in_specs=[pl.BlockSpec((block_rows, _LANES), lambda i: (i, 0))],
            out_specs=pl.BlockSpec((1, 8, _LANES), lambda i: (i, 0, 0)),
        ),
        compiler_params=pltpu.CompilerParams(
            # Blocks are independent -> on v7x they shard across both TCs.
            dimension_semantics=("parallel",),
            vmem_limit_bytes=_VMEM_LIMIT_BYTES,
        ),
        cost_estimate=cost,
    )(p2d)

    total = jnp.sum(partials)
    if tail_sum is not None:
        total = total + tail_sum
    return total


# ----------------------------------------------------------------------------
# MaskLayer equivalent (JAX / Pallas)
# ----------------------------------------------------------------------------
class MaskLayer:
    """JAX port of NeuroSurgeon's MaskLayer base class.

    Abstract pieces of the torch module (`forward`, `_init_mask`,
    `_init_subnet_transfer`, `reset_parameters`, `from_layer`) have no concrete
    semantics in the base class and are left unimplemented here.
    """

    _ALLOWED_ABLATIONS = (
        'none', 'randomly_sampled', 'zero_ablate', 'random_ablate',
        'complement_sampled', 'subnet_transfer',
    )

    def __init__(self, ablation: str, mask_unit: str, mask_bias: bool,
                 weight_mask_params: jax.Array,
                 bias_mask_params=None):
        self.ablation = ablation
        self.mask_unit = mask_unit
        self.mask_bias = mask_bias
        self.use_masks = True
        self.training = True
        self.weight_mask_params = weight_mask_params
        self.bias_mask_params = bias_mask_params

    # ---- property validation mirroring the torch module ----
    @property
    def ablation(self):
        return self._ablation

    @ablation.setter
    def ablation(self, value):
        if value not in self._ALLOWED_ABLATIONS:
            raise ValueError(
                'Only none, randomly_sampled, zero_ablate, random_ablate, '
                'subnet_transfer, and complement_sampled are supported')
        self._ablation = value

    @property
    def mask_bias(self):
        return self._mask_bias

    @mask_bias.setter
    def mask_bias(self, value):
        self._mask_bias = value

    @property
    def mask_unit(self):
        return self._mask_unit

    @mask_unit.setter
    def mask_unit(self, value):
        self._mask_unit = value

    @property
    def use_masks(self):
        return self._use_masks

    @use_masks.setter
    def use_masks(self, value):
        self._use_masks = value

    def train(self, train_bool):
        self.training = train_bool

    # ---- reference (non-kernel) mask; same transform as inside the kernel ----
    def _compute_mask(self, param_type: str) -> jax.Array:
        if param_type == 'weight_mask_params':
            p = self.weight_mask_params
        elif param_type == 'bias_mask_params':
            p = self.bias_mask_params
        else:
            raise ValueError(f'unknown param_type {param_type}')
        return jax.nn.sigmoid(p.astype(jnp.float32))

    # ---- hot path: Pallas-accelerated L0 ----
    def calculate_l0(self) -> jax.Array:
        l0 = sigmoid_mask_sum(self.weight_mask_params)
        if self.mask_bias:
            # Bias is a few KB: plain XLA; a separate pallas_call would be
            # pure dispatch/pipeline overhead.
            l0 = l0 + jnp.sum(
                jax.nn.sigmoid(self.bias_mask_params.astype(jnp.float32)))
        return l0

    def calculate_max_l0(self) -> int:
        max_l0 = int(self.weight_mask_params.size)
        if self.mask_bias:
            max_l0 += int(self.bias_mask_params.size)
        return max_l0

    def forward(self, *args, **kwargs):
        # TODO(synk): forward() is abstract in the base torch class; concrete
        # masked-linear/conv forwards live in subclasses.
        raise NotImplementedError


# ----------------------------------------------------------------------------
# Demo / smoke test
# ----------------------------------------------------------------------------
if __name__ == "__main__":
    key = jax.random.PRNGKey(0)
    keys = jax.random.split(key, 8)

    def ref_sum(*arrs):
        return sum(jnp.sum(jax.nn.sigmoid(a.astype(jnp.float32))) for a in arrs)

    # 1) Small aligned case (XLA fast path) with bias.
    w = jax.random.normal(keys[0], (32, 128), jnp.float32)
    b = jax.random.normal(keys[1], (32,), jnp.float32)
    layer = MaskLayer('none', 'weight', True, w, b)
    l0 = jax.block_until_ready(layer.calculate_l0())
    assert jnp.allclose(l0, ref_sum(w, b), rtol=1e-5, atol=1e-3), l0
    assert layer.calculate_max_l0() == 32 * 128 + 32

    # 2) Small unaligned case (XLA fast path).
    w2 = jax.random.normal(keys[2], (30, 100), jnp.float32)
    b2 = jax.random.normal(keys[3], (30,), jnp.float32)
    layer2 = MaskLayer('zero_ablate', 'weight', True, w2, b2)
    l0_2 = jax.block_until_ready(layer2.calculate_l0())
    assert jnp.allclose(l0_2, ref_sum(w2, b2), rtol=1e-5, atol=1e-3), l0_2
    assert layer2.calculate_max_l0() == 30 * 100 + 30

    # 3) Pallas path, rows divisible by block_rows (no in-kernel masking).
    w3 = jax.random.normal(keys[4], (512, 1024), jnp.float32)
    layer3 = MaskLayer('none', 'weight', False, w3, None)
    l0_3 = jax.block_until_ready(layer3.calculate_l0())
    assert jnp.allclose(l0_3, ref_sum(w3), rtol=1e-5, atol=1e-2), l0_3

    # 4) Pallas path with a partial last block (in-kernel row masking).
    w4 = jax.random.normal(keys[5], (1000, 160), jnp.float32)
    layer4 = MaskLayer('random_ablate', 'weight', False, w4, None)
    l0_4 = jax.block_until_ready(layer4.calculate_l0())
    assert jnp.allclose(l0_4, ref_sum(w4), rtol=1e-5, atol=1e-2), l0_4

    # 5) Pallas path with ragged tail (numel % 128 != 0) + partial block.
    w5 = jax.random.normal(keys[6], (1100, 150), jnp.float32)
    layer5 = MaskLayer('none', 'weight', False, w5, None)
    l0_5 = jax.block_until_ready(layer5.calculate_l0())
    assert jnp.allclose(l0_5, ref_sum(w5), rtol=1e-5, atol=1e-2), l0_5

    # 6) bf16 mask params (half the HBM traffic; cast to f32 inside kernel).
    w6 = jax.random.normal(keys[7], (512, 1024), jnp.float32).astype(jnp.bfloat16)
    layer6 = MaskLayer('none', 'weight', False, w6, None)
    l0_6 = jax.block_until_ready(layer6.calculate_l0())
    assert jnp.allclose(l0_6, ref_sum(w6), rtol=1e-5, atol=1e-2), l0_6

    print("KERNEL_OK")
</pallas_src>

<mosaic_0001>
module attributes {stable_mosaic.version = 11 : i64} {
  func.func @_sigmoid_partial_sum_kernel(%arg0: i32, %arg1: memref<1024x128xf32, #tpu.memory_space<vmem>>, %arg2: memref<1x8x128xf32, #tpu.memory_space<vmem>>) attributes {dimension_semantics = [#tpu.dimension_semantics<parallel>], iteration_bounds = array<i64: 4>, scalar_prefetch = 0 : i64, scratch_operands = 0 : i64, tpu.core_type = #tpu.core_type<tc>, window_params = [{transform_indices = @transform_0, window_bounds = array<i64: 1024, 128>}, {transform_indices = @transform_1, window_bounds = array<i64: 1, 8, 128>}]} {
    %c0 = arith.constant 0 : index
    %c0_0 = arith.constant 0 : index
    %0 = vector.load %arg1[%c0, %c0_0] : memref<1024x128xf32, #tpu.memory_space<vmem>>, vector<1024x128xf32>
    %cst = arith.constant 5.000000e-01 : f32
    %1 = vector.broadcast %cst : f32 to vector<1024x128xf32>
    %2 = arith.mulf %1, %0 : vector<1024x128xf32>
    %3 = math.tanh %2 : vector<1024x128xf32>
    %cst_1 = arith.constant 5.000000e-01 : f32
    %4 = vector.broadcast %cst_1 : f32 to vector<1024x128xf32>
    %5 = arith.mulf %4, %3 : vector<1024x128xf32>
    %cst_2 = arith.constant 5.000000e-01 : f32
    %6 = vector.broadcast %cst_2 : f32 to vector<1024x128xf32>
    %7 = arith.addf %5, %6 : vector<1024x128xf32>
    %8 = vector.shape_cast %7 : vector<1024x128xf32> to vector<128x8x128xf32>
    %cst_3 = arith.constant dense<0.000000e+00> : vector<8x128xf32>
    %9 = vector.multi_reduction <add>, %8, %cst_3 [0] : vector<128x8x128xf32> to vector<8x128xf32>
    %c0_4 = arith.constant 0 : index
    %c0_5 = arith.constant 0 : index
    %c0_6 = arith.constant 0 : index
    %10 = vector.load %arg2[%c0_4, %c0_5, %c0_6] : memref<1x8x128xf32, #tpu.memory_space<vmem>>, vector<1x8x128xf32>
    %11 = vector.shape_cast %10 : vector<1x8x128xf32> to vector<8x128xf32>
    %12 = vector.shape_cast %9 : vector<8x128xf32> to vector<1x8x128xf32>
    tpu.vector_store %arg2[%c0_4, %c0_5, %c0_6], %12 {strides = array<i32>} : memref<1x8x128xf32, #tpu.memory_space<vmem>>, vector<1x8x128xf32>,
    return
  }
  func.func @transform_0(%arg0: i32) -> (i32, i32) {
    %c0_i32 = arith.constant 0 : i32
    %c0_i32_0 = arith.constant 0 : i32
    return %arg0, %c0_i32 : i32, i32
  }
  func.func @transform_1(%arg0: i32) -> (i32, i32, i32) {
    %c0_i32 = arith.constant 0 : i32
    %c0_i32_0 = arith.constant 0 : i32
    %c0_i32_1 = arith.constant 0 : i32
    return %arg0, %c0_i32, %c0_i32_0 : i32, i32, i32
  }
}

</mosaic_0001>

<llo_original>
// kernel: tpu_custom_call.1
$region0: #{tpu_custom_call.1}
  #allocation0 [shape = 'u32[]', space=smem, size = 0x4, offset = 0x4, fixed_abs, tag = 'smem constant byte address 0x4 - core index']
  #allocation1 [shape = 'u32[144,128]{1,0:T(1,128)}', space=vmem, size = 0x12000, scoped, tag = 'internal scratch']
  %s0 = inlined_call_operand.hbm [shape: f32[4096,128], index: 0, kind: input, shape index: {}]
  %s1 = inlined_call_operand.hbm [shape: f32[4,8,128], index: 1, kind: output, shape index: {}]
  %s2 = sld [smem:[#allocation0]]
  $region41: #{tpu_custom_call.1} parent=0
    _
  %s4 = ssub.s32 1, %s2
  %s5 = scalar_select 0, %s4, %s2
  $region1: #{tpu_custom_call.1} parent=0
    #allocation2 [shape = 'u8[1048576]{0}', space=vmem, size = 0x100000, scoped, tag = 'input window, operand 0']
    #allocation3 [shape = 's32[2]{0}', space=sflag, size = 0x8, scoped, tag = 'scoped memory for tpu_custom_call.1']
    #allocation4 [shape = 's32[2]{0}', space=sflag, size = 0x8, scoped, tag = 'scoped memory for tpu_custom_call.1']
    #allocation5 [shape = 'u8[8192]{0}', space=vmem, size = 0x2000, scoped, tag = 'output window, operand 0']
    %6 = vsyncpa [#allocation3], 0
    %s7 = scalar_lea.sflag [#allocation3], 1
    %8 = vsyncpa %s7, 0
    %9 = vsyncpa [#allocation4], 0
    %s10 = scalar_lea.sflag [#allocation4], 1
    %11 = vsyncpa %s10, 0
    loop: start=0, step=1, limit=6
    $region2: #{tpu_custom_call.1} parent=1 // loop_pre_header
      _
    $region3: #{tpu_custom_call.1} parent=1 // loop_header
      %s13 = sphi 0, %s17
      %p14 = scmp.ge.s32.totalorder %s13, 6
      %s23 = sphi 0, %s25
      %s26 = sphi 0, %s23
      %s27 = sphi 0, %s26
      %s43 = sphi 0, %s27
      %s49 = sphi 0, %s51
      %s52 = sphi 0, %s49
      %s53 = sphi 0, %s52
      %s69 = sphi 0, %s53
    $region4: #{tpu_custom_call.1} parent=1 // loop_header_branch
      %16 = sbr.rel (%p14) target = $region8
    $region5: #{tpu_custom_call.1} parent=1 // loop_body
      %s18 = ssub.s32 %s13, 1
      %s19 = ssub.s32 %s13, 2
      %s20 = sadd.s32 %s13, 1
      %s21 = ssub.s32 %s13, %s20
      %p22 = scmp.eq.s32.totalorder %s21, 0
      %s24 = sadd.s32 %s23, 1
      %s25 = scalar_select %p22, %s23, %s24
      %p28 = pneg %p22
      %p29 = scmp.eq.s32.totalorder %s13, 3
      %p30 = por %p28, %p29
      %p31 = scmp.ne.s32.totalorder %s23, %s26
      %p32 = scmp.eq.s32.totalorder %s13, 0
      %p33 = por %p31, %p32
      %p34 = scmp.ne.s32.totalorder %s23, %s26
      %p35 = scmp.eq.s32.totalorder %s18, 3
      %p36 = por %p34, %p35
      %p37 = scmp.ne.s32.totalorder %s26, %s27
      %p38 = scmp.eq.s32.totalorder %s18, 0
      %p39 = por %p37, %p38
      %p40 = scmp.ne.s32.totalorder %s26, %s27
      %p41 = scmp.eq.s32.totalorder %s19, 3
      %p42 = por %p40, %p41
      %p44 = scmp.ne.s32.totalorder %s27, %s43
      %p45 = scmp.eq.s32.totalorder %s19, 0
      %p46 = por %p44, %p45
      %s47 = ssub.s32 %s13, %s20
      %p48 = scmp.eq.s32.totalorder %s47, 0
      %s50 = sadd.s32 %s49, 1
      %s51 = scalar_select %p48, %s49, %s50
      %p54 = pneg %p48
      %p55 = scmp.eq.s32.totalorder %s13, 3
      %p56 = por %p54, %p55
      %p57 = scmp.ne.s32.totalorder %s49, %s52
      %p58 = scmp.eq.s32.totalorder %s13, 0
      %p59 = por %p57, %p58
      %p60 = scmp.ne.s32.totalorder %s49, %s52
      %p61 = scmp.eq.s32.totalorder %s18, 3
      %p62 = por %p60, %p61
      %p63 = scmp.ne.s32.totalorder %s52, %s53
      %p64 = scmp.eq.s32.totalorder %s18, 0
      %p65 = por %p63, %p64
      %p66 = scmp.ne.s32.totalorder %s52, %s53
      %p67 = scmp.eq.s32.totalorder %s19, 3
      %p68 = por %p66, %p67
      %p70 = scmp.ne.s32.totalorder %s53, %s69
      %p71 = scmp.eq.s32.totalorder %s19, 0
      %p72 = por %p70, %p71
      %p73 = scmp.le.s32.totalorder 1, %s13
      %p74 = scmp.lt.s32.totalorder %s13, 5
      %p75 = pnand %p73, %p74
      %p76 = pneg %p75
      // Predicated region
      $region9: #{tpu_custom_call.1} parent=5 // pred_check
        _
      $region10: #{tpu_custom_call.1} parent=5 // pred_check_branch
        %78 = sbr.rel (%p75) target = $region12
      $region11: #{tpu_custom_call.1} parent=5 // pred_region
        %s79 = ssub.s32 %s13, 1
      $region12: #{tpu_custom_call.1} parent=5 // pred_fallthru
        _
      %p80 = scmp.lt.s32.totalorder %s13, 4
      // Predicated region
      $region13: #{tpu_custom_call.1} parent=5 // pred_check
        %p81 = pneg %p80
      $region14: #{tpu_custom_call.1} parent=5 // pred_check_branch
        %83 = sbr.rel (%p81) target = $region16
      $region15: #{tpu_custom_call.1} parent=5 // pred_region
        // Predicated region
        $region17: #{tpu_custom_call.1} parent=15 // pred_check
          %p84 = pneg %p33
        $region18: #{tpu_custom_call.1} parent=15 // pred_check_branch
          %86 = sbr.rel (%p84) target = $region20
        $region19: #{tpu_custom_call.1} parent=15 // pred_region
          %s87 = sand.u32 %s23, 1
          %s88 = scalar_lea.sflag [#allocation3], %s87
          %s89 = sand.u32 %s23, 1
          %s90 = smul.addr %s89, 1024
          %s91 = scalar_lea.vmem [#allocation2], %s90
          %s92 = smul.u32 128, %s13
          %s94 = ssub.s32 16384, 16384
          %95 = vsyncadd %s88, %s94
          %s96 = smul.addr %s92, 128
          %s97 = scalar_lea.hbm %s0, %s96
          %s98 = sshll.u32 %s91, 4
          %s99 = int_to_ptr.vmem [resolvable:$true] %s98
          %104 = dma.hbm_to_vmem [thread:$0]  %s97, 16384, %s99, %s88, 128, 128, 8
        $region20: #{tpu_custom_call.1} parent=15 // pred_fallthru
          _
      $region16: #{tpu_custom_call.1} parent=5 // pred_fallthru
        _
      %p105 = scmp.le.s32.totalorder 1, %s13
      %p106 = scmp.lt.s32.totalorder %s13, 5
      %p107 = pnand %p105, %p106
      %p108 = pneg %p107
      // Predicated region
      $region21: #{tpu_custom_call.1} parent=5 // pred_check
        _
      $region22: #{tpu_custom_call.1} parent=5 // pred_check_branch
        %110 = sbr.rel (%p107) target = $region24
      $region23: #{tpu_custom_call.1} parent=5 // pred_region
        %s111 = ssub.s32 %s13, 1
        %s112 = sand.u32 %s26, 1
        %s113 = scalar_lea.sflag [#allocation3], %s112
        %s114 = sand.u32 %s26, 1
        %s115 = smul.addr %s114, 1024
        %s116 = scalar_lea.vmem [#allocation2], %s115
        // Predicated region
        $region25: #{tpu_custom_call.1} parent=23 // pred_check
          %p117 = pneg %p39
        $region26: #{tpu_custom_call.1} parent=23 // pred_check_branch
          %119 = sbr.rel (%p117) target = $region28
        $region27: #{tpu_custom_call.1} parent=23 // pred_region
          %120 = dma.done %s113, 16384
        $region28: #{tpu_custom_call.1} parent=23 // pred_fallthru
          _
        %s121 = sand.u32 %s26, 1
        %s122 = scalar_lea.sflag [#allocation3], %s121
        %s123 = sand.u32 %s26, 1
        %s124 = smul.addr %s123, 1024
        %s125 = scalar_lea.vmem [#allocation2], %s124
        %p126 = pneg %p39
        %p127 = pneg %p36
        %p128 = pneg %p65
        %p129 = pneg %p62
        %s130 = sand.u32 %s52, 1
        %s131 = scalar_lea.sflag [#allocation4], %s130
        %s132 = sand.u32 %s52, 1
        %s133 = smul.addr %s132, 8
        %s134 = scalar_lea.vmem [#allocation5], %s133
        %s135 = smul.u32 128, %s18
        %v136 = vld [vmem:[%s116] sm:$0xff]
        %v137 = vld [vmem:[%s116 + $0x8] sm:$0xff]
        %v138 = vld [vmem:[%s116 + $0x10] sm:$0xff]
        %v139 = vld [vmem:[%s116 + $0x18] sm:$0xff]
        %v140 = vld [vmem:[%s116 + $0x20] sm:$0xff]
        %v141 = vld [vmem:[%s116 + $0x28] sm:$0xff]
        %v142 = vld [vmem:[%s116 + $0x30] sm:$0xff]
        %v143 = vld [vmem:[%s116 + $0x38] sm:$0xff]
        %v144 = vld [vmem:[%s116 + $0x40] sm:$0xff]
        %v145 = vld [vmem:[%s116 + $0x48] sm:$0xff]
        %v146 = vld [vmem:[%s116 + $0x50] sm:$0xff]
        %v147 = vld [vmem:[%s116 + $0x58] sm:$0xff]
        %v148 = vld [vmem:[%s116 + $0x60] sm:$0xff]
        %v149 = vld [vmem:[%s116 + $0x68] sm:$0xff]
        %v150 = vld [vmem:[%s116 + $0x70] sm:$0xff]
        %v151 = vld [vmem:[%s116 + $0x78] sm:$0xff]
        %v152 = vld [vmem:[%s116 + $0x80] sm:$0xff]
        %v153 = vld [vmem:[%s116 + $0x88] sm:$0xff]
        %v154 = vld [vmem:[%s116 + $0x90] sm:$0xff]
        %v155 = vld [vmem:[%s116 + $0x98] sm:$0xff]
        %v156 = vld [vmem:[%s116 + $0xa0] sm:$0xff]
        %v157 = vld [vmem:[%s116 + $0xa8] sm:$0xff]
        %v158 = vld [vmem:[%s116 + $0xb0] sm:$0xff]
        %v159 = vld [vmem:[%s116 + $0xb8] sm:$0xff]
        %v160 = vld [vmem:[%s116 + $0xc0] sm:$0xff]
        %v161 = vld [vmem:[%s116 + $0xc8] sm:$0xff]
        %v162 = vld [vmem:[%s116 + $0xd0] sm:$0xff]
        %v163 = vld [vmem:[%s116 + $0xd8] sm:$0xff]
        %v164 = vld [vmem:[%s116 + $0xe0] sm:$0xff]
        %v165 = vld [vmem:[%s116 + $0xe8] sm:$0xff]
        %v166 = vld [vmem:[%s116 + $0xf0] sm:$0xff]
        %v167 = vld [vmem:[%s116 + $0xf8] sm:$0xff]
        %v168 = vld [vmem:[%s116 + $0x100] sm:$0xff]
        %v169 = vld [vmem:[%s116 + $0x108] sm:$0xff]
        %v170 = vld [vmem:[%s116 + $0x110] sm:$0xff]
        %v171 = vld [vmem:[%s116 + $0x118] sm:$0xff]
        %v172 = vld [vmem:[%s116 + $0x120] sm:$0xff]
        %v173 = vld [vmem:[%s116 + $0x128] sm:$0xff]
        %v174 = vld [vmem:[%s116 + $0x130] sm:$0xff]
        %v175 = vld [vmem:[%s116 + $0x138] sm:$0xff]
        %v176 = vld [vmem:[%s116 + $0x140] sm:$0xff]
        %v177 = vld [vmem:[%s116 + $0x148] sm:$0xff]
        %v178 = vld [vmem:[%s116 + $0x150] sm:$0xff]
        %v179 = vld [vmem:[%s116 + $0x158] sm:$0xff]
        %v180 = vld [vmem:[%s116 + $0x160] sm:$0xff]
        %v181 = vld [vmem:[%s116 + $0x168] sm:$0xff]
        %v182 = vld [vmem:[%s116 + $0x170] sm:$0xff]
        %v183 = vld [vmem:[%s116 + $0x178] sm:$0xff]
        %v184 = vld [vmem:[%s116 + $0x180] sm:$0xff]
        %v185 = vld [vmem:[%s116 + $0x188] sm:$0xff]
        %v186 = vld [vmem:[%s116 + $0x190] sm:$0xff]
        %v187 = vld [vmem:[%s116 + $0x198] sm:$0xff]
        %v188 = vld [vmem:[%s116 + $0x1a0] sm:$0xff]
        %v189 = vld [vmem:[%s116 + $0x1a8] sm:$0xff]
        %v190 = vld [vmem:[%s116 + $0x1b0] sm:$0xff]
        %v191 = vld [vmem:[%s116 + $0x1b8] sm:$0xff]
        %v192 = vld [vmem:[%s116 + $0x1c0] sm:$0xff]
        %v193 = vld [vmem:[%s116 + $0x1c8] sm:$0xff]
        %v194 = vld [vmem:[%s116 + $0x1d0] sm:$0xff]
        %v195 = vld [vmem:[%s116 + $0x1d8] sm:$0xff]
        %v196 = vld [vmem:[%s116 + $0x1e0] sm:$0xff]
        %v197 = vld [vmem:[%s116 + $0x1e8] sm:$0xff]
        %v198 = vld [vmem:[%s116 + $0x1f0] sm:$0xff]
        %v199 = vld [vmem:[%s116 + $0x1f8] sm:$0xff]
        %v200 = vld [vmem:[%s116 + $0x200] sm:$0xff]
        %v201 = vld [vmem:[%s116 + $0x208] sm:$0xff]
        %v202 = vld [vmem:[%s116 + $0x210] sm:$0xff]
        %v203 = vld [vmem:[%s116 + $0x218] sm:$0xff]
        %v204 = vld [vmem:[%s116 + $0x220] sm:$0xff]
        %v205 = vld [vmem:[%s116 + $0x228] sm:$0xff]
        %v206 = vld [vmem:[%s116 + $0x230] sm:$0xff]
        %v207 = vld [vmem:[%s116 + $0x238] sm:$0xff]
        %v208 = vld [vmem:[%s116 + $0x240] sm:$0xff]
        %v209 = vld [vmem:[%s116 + $0x248] sm:$0xff]
        %v210 = vld [vmem:[%s116 + $0x250] sm:$0xff]
        %v211 = vld [vmem:[%s116 + $0x258] sm:$0xff]
        %v212 = vld [vmem:[%s116 + $0x260] sm:$0xff]
        %v213 = vld [vmem:[%s116 + $0x268] sm:$0xff]
        %v214 = vld [vmem:[%s116 + $0x270] sm:$0xff]
        %v215 = vld [vmem:[%s116 + $0x278] sm:$0xff]
        %v216 = vld [vmem:[%s116 + $0x280] sm:$0xff]
        %v217 = vld [vmem:[%s116 + $0x288] sm:$0xff]
        %v218 = vld [vmem:[%s116 + $0x290] sm:$0xff]
        %v219 = vld [vmem:[%s116 + $0x298] sm:$0xff]
        %v220 = vld [vmem:[%s116 + $0x2a0] sm:$0xff]
        %v221 = vld [vmem:[%s116 + $0x2a8] sm:$0xff]
        %v222 = vld [vmem:[%s116 + $0x2b0] sm:$0xff]
        %v223 = vld [vmem:[%s116 + $0x2b8] sm:$0xff]
        %v224 = vld [vmem:[%s116 + $0x2c0] sm:$0xff]
        %v225 = vld [vmem:[%s116 + $0x2c8] sm:$0xff]
        %v226 = vld [vmem:[%s116 + $0x2d0] sm:$0xff]
        %v227 = vld [vmem:[%s116 + $0x2d8] sm:$0xff]
        %v228 = vld [vmem:[%s116 + $0x2e0] sm:$0xff]
        %v229 = vld [vmem:[%s116 + $0x2e8] sm:$0xff]
        %v230 = vld [vmem:[%s116 + $0x2f0] sm:$0xff]
        %v231 = vld [vmem:[%s116 + $0x2f8] sm:$0xff]
        %v232 = vld [vmem:[%s116 + $0x300] sm:$0xff]
        %v233 = vld [vmem:[%s116 + $0x308] sm:$0xff]
        %v234 = vld [vmem:[%s116 + $0x310] sm:$0xff]
        %v235 = vld [vmem:[%s116 + $0x318] sm:$0xff]
        %v236 = vld [vmem:[%s116 + $0x320] sm:$0xff]
        %v237 = vld [vmem:[%s116 + $0x328] sm:$0xff]
        %v238 = vld [vmem:[%s116 + $0x330] sm:$0xff]
        %v239 = vld [vmem:[%s116 + $0x338] sm:$0xff]
        %v240 = vld [vmem:[%s116 + $0x340] sm:$0xff]
        %v241 = vld [vmem:[%s116 + $0x348] sm:$0xff]
        %v242 = vld [vmem:[%s116 + $0x350] sm:$0xff]
        %v243 = vld [vmem:[%s116 + $0x358] sm:$0xff]
        %v244 = vld [vmem:[%s116 + $0x360] sm:$0xff]
        %v245 = vld [vmem:[%s116 + $0x368] sm:$0xff]
        %v246 = vld [vmem:[%s116 + $0x370] sm:$0xff]
        %v247 = vld [vmem:[%s116 + $0x378] sm:$0xff]
        %v248 = vld [vmem:[%s116 + $0x380] sm:$0xff]
        %v249 = vld [vmem:[%s116 + $0x388] sm:$0xff]
        %v250 = vld [vmem:[%s116 + $0x390] sm:$0xff]
        %v251 = vld [vmem:[%s116 + $0x398] sm:$0xff]
        %v252 = vld [vmem:[%s116 + $0x3a0] sm:$0xff]
        %v253 = vld [vmem:[%s116 + $0x3a8] sm:$0xff]
        %v254 = vld [vmem:[%s116 + $0x3b0] sm:$0xff]
        %v255 = vld [vmem:[%s116 + $0x3b8] sm:$0xff]
        %v256 = vld [vmem:[%s116 + $0x3c0] sm:$0xff]
        %v257 = vld [vmem:[%s116 + $0x3c8] sm:$0xff]
        %v258 = vld [vmem:[%s116 + $0x3d0] sm:$0xff]
        %v259 = vld [vmem:[%s116 + $0x3d8] sm:$0xff]
        %v260 = vld [vmem:[%s116 + $0x3e0] sm:$0xff]
        %v261 = vld [vmem:[%s116 + $0x3e8] sm:$0xff]
        %v262 = vld [vmem:[%s116 + $0x3f0] sm:$0xff]
        %v263 = vld [vmem:[%s116 + $0x3f8] sm:$0xff]
        %v264 = vmul.f32 %v136, 0.5
        %v265 = vmul.f32 %v137, 0.5
        %v266 = vmul.f32 %v138, 0.5
        %v267 = vmul.f32 %v139, 0.5
        %v268 = vmul.f32 %v140, 0.5
        %v269 = vmul.f32 %v141, 0.5
        %v270 = vmul.f32 %v142, 0.5
        %v271 = vmul.f32 %v143, 0.5
        %v272 = vmul.f32 %v144, 0.5
        %v273 = vmul.f32 %v145, 0.5
        %v274 = vmul.f32 %v146, 0.5
        %v275 = vmul.f32 %v147, 0.5
        %v276 = vmul.f32 %v148, 0.5
        %v277 = vmul.f32 %v149, 0.5
        %v278 = vmul.f32 %v150, 0.5
        %v279 = vmul.f32 %v151, 0.5
        %v280 = vmul.f32 %v152, 0.5
        %v281 = vmul.f32 %v153, 0.5
        %v282 = vmul.f32 %v154, 0.5
        %v283 = vmul.f32 %v155, 0.5
        %v284 = vmul.f32 %v156, 0.5
        %v285 = vmul.f32 %v157, 0.5
        %v286 = vmul.f32 %v158, 0.5
        %v287 = vmul.f32 %v159, 0.5
        %v288 = vmul.f32 %v160, 0.5
        %v289 = vmul.f32 %v161, 0.5
        %v290 = vmul.f32 %v162, 0.5
        %v291 = vmul.f32 %v163, 0.5
        %v292 = vmul.f32 %v164, 0.5
        %v293 = vmul.f32 %v165, 0.5
        %v294 = vmul.f32 %v166, 0.5
        %v295 = vmul.f32 %v167, 0.5
        %v296 = vmul.f32 %v168, 0.5
        %v297 = vmul.f32 %v169, 0.5
        %v298 = vmul.f32 %v170, 0.5
        %v299 = vmul.f32 %v171, 0.5
        %v300 = vmul.f32 %v172, 0.5
        %v301 = vmul.f32 %v173, 0.5
        %v302 = vmul.f32 %v174, 0.5
        %v303 = vmul.f32 %v175, 0.5
        %v304 = vmul.f32 %v176, 0.5
        %v305 = vmul.f32 %v177, 0.5
        %v306 = vmul.f32 %v178, 0.5
        %v307 = vmul.f32 %v179, 0.5
        %v308 = vmul.f32 %v180, 0.5
        %v309 = vmul.f32 %v181, 0.5
        %v310 = vmul.f32 %v182, 0.5
        %v311 = vmul.f32 %v183, 0.5
        %v312 = vmul.f32 %v184, 0.5
        %v313 = vmul.f32 %v185, 0.5
        %v314 = vmul.f32 %v186, 0.5
        %v315 = vmul.f32 %v187, 0.5
        %v316 = vmul.f32 %v188, 0.5
        %v317 = vmul.f32 %v189, 0.5
        %v318 = vmul.f32 %v190, 0.5
        %v319 = vmul.f32 %v191, 0.5
        %v320 = vmul.f32 %v192, 0.5
        %v321 = vmul.f32 %v193, 0.5
        %v322 = vmul.f32 %v194, 0.5
        %v323 = vmul.f32 %v195, 0.5
        %v324 = vmul.f32 %v196, 0.5
        %v325 = vmul.f32 %v197, 0.5
        %v326 = vmul.f32 %v198, 0.5
        %v327 = vmul.f32 %v199, 0.5
        %v328 = vmul.f32 %v200, 0.5
        %v329 = vmul.f32 %v201, 0.5
        %v330 = vmul.f32 %v202, 0.5
        %v331 = vmul.f32 %v203, 0.5
        %v332 = vmul.f32 %v204, 0.5
        %v333 = vmul.f32 %v205, 0.5
        %v334 = vmul.f32 %v206, 0.5
        %v335 = vmul.f32 %v207, 0.5
        %v336 = vmul.f32 %v208, 0.5
        %v337 = vmul.f32 %v209, 0.5
        %v338 = vmul.f32 %v210, 0.5
        %v339 = vmul.f32 %v211, 0.5
        %v340 = vmul.f32 %v212, 0.5
        %v341 = vmul.f32 %v213, 0.5
        %v342 = vmul.f32 %v214, 0.5
        %v343 = vmul.f32 %v215, 0.5
        %v344 = vmul.f32 %v216, 0.5
        %v345 = vmul.f32 %v217, 0.5
        %v346 = vmul.f32 %v218, 0.5
        %v347 = vmul.f32 %v219, 0.5
        %v348 = vmul.f32 %v220, 0.5
        %v349 = vmul.f32 %v221, 0.5
        %v350 = vmul.f32 %v222, 0.5
        %v351 = vmul.f32 %v223, 0.5
        %v352 = vmul.f32 %v224, 0.5
        %v353 = vmul.f32 %v225, 0.5
        %v354 = vmul.f32 %v226, 0.5
        %v355 = vmul.f32 %v227, 0.5
        %v356 = vmul.f32 %v228, 0.5
        %v357 = vmul.f32 %v229, 0.5
        %v358 = vmul.f32 %v230, 0.5
        %v359 = vmul.f32 %v231, 0.5
        %v360 = vmul.f32 %v232, 0.5
        %v361 = vmul.f32 %v233, 0.5
        %v362 = vmul.f32 %v234, 0.5
        %v363 = vmul.f32 %v235, 0.5
        %v364 = vmul.f32 %v236, 0.5
        %v365 = vmul.f32 %v237, 0.5
        %v366 = vmul.f32 %v238, 0.5
        %v367 = vmul.f32 %v239, 0.5
        %v368 = vmul.f32 %v240, 0.5
        %v369 = vmul.f32 %v241, 0.5
        %v370 = vmul.f32 %v242, 0.5
        %v371 = vmul.f32 %v243, 0.5
        %v372 = vmul.f32 %v244, 0.5
        %v373 = vmul.f32 %v245, 0.5
        %v374 = vmul.f32 %v246, 0.5
        %v375 = vmul.f32 %v247, 0.5
        %v376 = vmul.f32 %v248, 0.5
        %v377 = vmul.f32 %v249, 0.5
        %v378 = vmul.f32 %v250, 0.5
        %v379 = vmul.f32 %v251, 0.5
        %v380 = vmul.f32 %v252, 0.5
        %v381 = vmul.f32 %v253, 0.5
        %v382 = vmul.f32 %v254, 0.5
        %v383 = vmul.f32 %v255, 0.5
        %v384 = vmul.f32 %v256, 0.5
        %v385 = vmul.f32 %v257, 0.5
        %v386 = vmul.f32 %v258, 0.5
        %v387 = vmul.f32 %v259, 0.5
        %v388 = vmul.f32 %v260, 0.5
        %v389 = vmul.f32 %v261, 0.5
        %v390 = vmul.f32 %v262, 0.5
        %v391 = vmul.f32 %v263, 0.5
        %v392 = vtanh.pop %v264
        %v393 = vtanh.pop %v265
        %v394 = vtanh.pop %v266
        %v395 = vtanh.pop %v267
        %v396 = vtanh.pop %v268
        %v397 = vtanh.pop %v269
        %v398 = vtanh.pop %v270
        %v399 = vtanh.pop %v271
        %v400 = vtanh.pop %v272
        %v401 = vtanh.pop %v273
        %v402 = vtanh.pop %v274
        %v403 = vtanh.pop %v275
        %v404 = vtanh.pop %v276
        %v405 = vtanh.pop %v277
        %v406 = vtanh.pop %v278
        %v407 = vtanh.pop %v279
        %v408 = vtanh.pop %v280
        %v409 = vtanh.pop %v281
        %v410 = vtanh.pop %v282
        %v411 = vtanh.pop %v283
        %v412 = vtanh.pop %v284
        %v413 = vtanh.pop %v285
        %v414 = vtanh.pop %v286
        %v415 = vtanh.pop %v287
        %v416 = vtanh.pop %v288
        %v417 = vtanh.pop %v289
        %v418 = vtanh.pop %v290
        %v419 = vtanh.pop %v291
        %v420 = vtanh.pop %v292
        %v421 = vtanh.pop %v293
        %v422 = vtanh.pop %v294
        %v423 = vtanh.pop %v295
        %v424 = vtanh.pop %v296
        %v425 = vtanh.pop %v297
        %v426 = vtanh.pop %v298
        %v427 = vtanh.pop %v299
        %v428 = vtanh.pop %v300
        %v429 = vtanh.pop %v301
        %v430 = vtanh.pop %v302
        %v431 = vtanh.pop %v303
        %v432 = vtanh.pop %v304
        %v433 = vtanh.pop %v305
        %v434 = vtanh.pop %v306
        %v435 = vtanh.pop %v307
        %v436 = vtanh.pop %v308
        %v437 = vtanh.pop %v309
        %v438 = vtanh.pop %v310
        %v439 = vtanh.pop %v311
        %v440 = vtanh.pop %v312
        %v441 = vtanh.pop %v313
        %v442 = vtanh.pop %v314
        %v443 = vtanh.pop %v315
        %v444 = vtanh.pop %v316
        %v445 = vtanh.pop %v317
        %v446 = vtanh.pop %v318
        %v447 = vtanh.pop %v319
        %v448 = vtanh.pop %v320
        %v449 = vtanh.pop %v321
        %v450 = vtanh.pop %v322
        %v451 = vtanh.pop %v323
        %v452 = vtanh.pop %v324
        %v453 = vtanh.pop %v325
        %v454 = vtanh.pop %v326
        %v455 = vtanh.pop %v327
        %v456 = vtanh.pop %v328
        %v457 = vtanh.pop %v329
        %v458 = vtanh.pop %v330
        %v459 = vtanh.pop %v331
        %v460 = vtanh.pop %v332
        %v461 = vtanh.pop %v333
        %v462 = vtanh.pop %v334
        %v463 = vtanh.pop %v335
        %v464 = vtanh.pop %v336
        %v465 = vtanh.pop %v337
        %v466 = vtanh.pop %v338
        %v467 = vtanh.pop %v339
        %v468 = vtanh.pop %v340
        %v469 = vtanh.pop %v341
        %v470 = vtanh.pop %v342
        %v471 = vtanh.pop %v343
        %v472 = vtanh.pop %v344
        %v473 = vtanh.pop %v345
        %v474 = vtanh.pop %v346
        %v475 = vtanh.pop %v347
        %v476 = vtanh.pop %v348
        %v477 = vtanh.pop %v349
        %v478 = vtanh.pop %v350
        %v479 = vtanh.pop %v351
        %v480 = vtanh.pop %v352
        %v481 = vtanh.pop %v353
        %v482 = vtanh.pop %v354
        %v483 = vtanh.pop %v355
        %v484 = vtanh.pop %v356
        %v485 = vtanh.pop %v357
        %v486 = vtanh.pop %v358
        %v487 = vtanh.pop %v359
        %v488 = vtanh.pop %v360
        %v489 = vtanh.pop %v361
        %v490 = vtanh.pop %v362
        %v491 = vtanh.pop %v363
        %v492 = vtanh.pop %v364
        %v493 = vtanh.pop %v365
        %v494 = vtanh.pop %v366
        %v495 = vtanh.pop %v367
        %v496 = vtanh.pop %v368
        %v497 = vtanh.pop %v369
        %v498 = vtanh.pop %v370
        %v499 = vtanh.pop %v371
        %v500 = vtanh.pop %v372
        %v501 = vtanh.pop %v373
        %v502 = vtanh.pop %v374
        %v503 = vtanh.pop %v375
        %v504 = vtanh.pop %v376
        %v505 = vtanh.pop %v377
        %v506 = vtanh.pop %v378
        %v507 = vtanh.pop %v379
        %v508 = vtanh.pop %v380
        %v509 = vtanh.pop %v381
        %v510 = vtanh.pop %v382
        %v511 = vtanh.pop %v383
        %v512 = vtanh.pop %v384
        %v513 = vtanh.pop %v385
        %v514 = vtanh.pop %v386
        %v515 = vtanh.pop %v387
        %v516 = vtanh.pop %v388
        %v517 = vtanh.pop %v389
        %v518 = vtanh.pop %v390
        %v519 = vtanh.pop %v391
        %v520 = vmul.f32 %v392, 0.5
        %v521 = vmul.f32 %v393, 0.5
        %v522 = vmul.f32 %v394, 0.5
        %v523 = vmul.f32 %v395, 0.5
        %v524 = vmul.f32 %v396, 0.5
        %v525 = vmul.f32 %v397, 0.5
        %v526 = vmul.f32 %v398, 0.5
        %v527 = vmul.f32 %v399, 0.5
        %v528 = vmul.f32 %v400, 0.5
        %v529 = vmul.f32 %v401, 0.5
        %v530 = vmul.f32 %v402, 0.5
        %v531 = vmul.f32 %v403, 0.5
        %v532 = vmul.f32 %v404, 0.5
        %v533 = vmul.f32 %v405, 0.5
        %v534 = vmul.f32 %v406, 0.5
        %v535 = vmul.f32 %v407, 0.5
        %v536 = vmul.f32 %v408, 0.5
        %v537 = vmul.f32 %v409, 0.5
        %v538 = vmul.f32 %v410, 0.5
        %v539 = vmul.f32 %v411, 0.5
        %v540 = vmul.f32 %v412, 0.5
        %v541 = vmul.f32 %v413, 0.5
        %v542 = vmul.f32 %v414, 0.5
        %v543 = vmul.f32 %v415, 0.5
        %v544 = vmul.f32 %v416, 0.5
        %v545 = vmul.f32 %v417, 0.5
        %v546 = vmul.f32 %v418, 0.5
        %v547 = vmul.f32 %v419, 0.5
        %v548 = vmul.f32 %v420, 0.5
        %v549 = vmul.f32 %v421, 0.5
        %v550 = vmul.f32 %v422, 0.5
        %v551 = vmul.f32 %v423, 0.5
        %v552 = vmul.f32 %v424, 0.5
        %v553 = vmul.f32 %v425, 0.5
        %v554 = vmul.f32 %v426, 0.5
        %v555 = vmul.f32 %v427, 0.5
        %v556 = vmul.f32 %v428, 0.5
        %v557 = vmul.f32 %v429, 0.5
        %v558 = vmul.f32 %v430, 0.5
        %v559 = vmul.f32 %v431, 0.5
        %v560 = vmul.f32 %v432, 0.5
        %v561 = vmul.f32 %v433, 0.5
        %v562 = vmul.f32 %v434, 0.5
        %v563 = vmul.f32 %v435, 0.5
        %v564 = vmul.f32 %v436, 0.5
        %v565 = vmul.f32 %v437, 0.5
        %v566 = vmul.f32 %v438, 0.5
        %v567 = vmul.f32 %v439, 0.5
        %v568 = vmul.f32 %v440, 0.5
        %v569 = vmul.f32 %v441, 0.5
        %v570 = vmul.f32 %v442, 0.5
        %v571 = vmul.f32 %v443, 0.5
        %v572 = vmul.f32 %v444, 0.5
        %v573 = vmul.f32 %v445, 0.5
        %v574 = vmul.f32 %v446, 0.5
        %v575 = vmul.f32 %v447, 0.5
        %v576 = vmul.f32 %v448, 0.5
        %v577 = vmul.f32 %v449, 0.5
        %v578 = vmul.f32 %v450, 0.5
        %v579 = vmul.f32 %v451, 0.5
        %v580 = vmul.f32 %v452, 0.5
        %v581 = vmul.f32 %v453, 0.5
        %v582 = vmul.f32 %v454, 0.5
        %v583 = vmul.f32 %v455, 0.5
        %v584 = vmul.f32 %v456, 0.5
        %v585 = vmul.f32 %v457, 0.5
        %v586 = vmul.f32 %v458, 0.5
        %v587 = vmul.f32 %v459, 0.5
        %v588 = vmul.f32 %v460, 0.5
        %v589 = vmul.f32 %v461, 0.5
        %v590 = vmul.f32 %v462, 0.5
        %v591 = vmul.f32 %v463, 0.5
        %v592 = vmul.f32 %v464, 0.5
        %v593 = vmul.f32 %v465, 0.5
        %v594 = vmul.f32 %v466, 0.5
        %v595 = vmul.f32 %v467, 0.5
        %v596 = vmul.f32 %v468, 0.5
        %v597 = vmul.f32 %v469, 0.5
        %v598 = vmul.f32 %v470, 0.5
        %v599 = vmul.f32 %v471, 0.5
        %v600 = vmul.f32 %v472, 0.5
        %v601 = vmul.f32 %v473, 0.5
        %v602 = vmul.f32 %v474, 0.5
        %v603 = vmul.f32 %v475, 0.5
        %v604 = vmul.f32 %v476, 0.5
        %v605 = vmul.f32 %v477, 0.5
        %v606 = vmul.f32 %v478, 0.5
        %v607 = vmul.f32 %v479, 0.5
        %v608 = vmul.f32 %v480, 0.5
        %v609 = vmul.f32 %v481, 0.5
        %v610 = vmul.f32 %v482, 0.5
        %v611 = vmul.f32 %v483, 0.5
        %v612 = vmul.f32 %v484, 0.5
        %v613 = vmul.f32 %v485, 0.5
        %v614 = vmul.f32 %v486, 0.5
        %v615 = vmul.f32 %v487, 0.5
        %v616 = vmul.f32 %v488, 0.5
        %v617 = vmul.f32 %v489, 0.5
        %v618 = vmul.f32 %v490, 0.5
        %v619 = vmul.f32 %v491, 0.5
        %v620 = vmul.f32 %v492, 0.5
        %v621 = vmul.f32 %v493, 0.5
        %v622 = vmul.f32 %v494, 0.5
        %v623 = vmul.f32 %v495, 0.5
        %v624 = vmul.f32 %v496, 0.5
        %v625 = vmul.f32 %v497, 0.5
        %v626 = vmul.f32 %v498, 0.5
        %v627 = vmul.f32 %v499, 0.5
        %v628 = vmul.f32 %v500, 0.5
        %v629 = vmul.f32 %v501, 0.5
        %v630 = vmul.f32 %v502, 0.5
        %v631 = vmul.f32 %v503, 0.5
        %v632 = vmul.f32 %v504, 0.5
        %v633 = vmul.f32 %v505, 0.5
        %v634 = vmul.f32 %v506, 0.5
        %v635 = vmul.f32 %v507, 0.5
        %v636 = vmul.f32 %v508, 0.5
        %v637 = vmul.f32 %v509, 0.5
        %v638 = vmul.f32 %v510, 0.5
        %v639 = vmul.f32 %v511, 0.5
        %v640 = vmul.f32 %v512, 0.5
        %v641 = vmul.f32 %v513, 0.5
        %v642 = vmul.f32 %v514, 0.5
        %v643 = vmul.f32 %v515, 0.5
        %v644 = vmul.f32 %v516, 0.5
        %v645 = vmul.f32 %v517, 0.5
        %v646 = vmul.f32 %v518, 0.5
        %v647 = vmul.f32 %v519, 0.5
        %v648 = vadd.f32 %v520, 0.5
        %v649 = vadd.f32 %v521, 0.5
        %v650 = vadd.f32 %v522, 0.5
        %v651 = vadd.f32 %v523, 0.5
        %v652 = vadd.f32 %v524, 0.5
        %v653 = vadd.f32 %v525, 0.5
        %v654 = vadd.f32 %v526, 0.5
        %v655 = vadd.f32 %v527, 0.5
        %v656 = vadd.f32 %v528, 0.5
        %v657 = vadd.f32 %v529, 0.5
        %v658 = vadd.f32 %v530, 0.5
        %v659 = vadd.f32 %v531, 0.5
        %v660 = vadd.f32 %v532, 0.5
        %v661 = vadd.f32 %v533, 0.5
        %v662 = vadd.f32 %v534, 0.5
        %v663 = vadd.f32 %v535, 0.5
        %v664 = vadd.f32 %v536, 0.5
        %v665 = vadd.f32 %v537, 0.5
        %v666 = vadd.f32 %v538, 0.5
        %v667 = vadd.f32 %v539, 0.5
        %v668 = vadd.f32 %v540, 0.5
        %v669 = vadd.f32 %v541, 0.5
        %v670 = vadd.f32 %v542, 0.5
        %v671 = vadd.f32 %v543, 0.5
        %v672 = vadd.f32 %v544, 0.5
        %v673 = vadd.f32 %v545, 0.5
        %v674 = vadd.f32 %v546, 0.5
        %v675 = vadd.f32 %v547, 0.5
        %v676 = vadd.f32 %v548, 0.5
        %v677 = vadd.f32 %v549, 0.5
        %v678 = vadd.f32 %v550, 0.5
        %v679 = vadd.f32 %v551, 0.5
        %v680 = vadd.f32 %v552, 0.5
        %v681 = vadd.f32 %v553, 0.5
        %v682 = vadd.f32 %v554, 0.5
        %v683 = vadd.f32 %v555, 0.5
        %v684 = vadd.f32 %v556, 0.5
        %v685 = vadd.f32 %v557, 0.5
        %v686 = vadd.f32 %v558, 0.5
        %v687 = vadd.f32 %v559, 0.5
        %v688 = vadd.f32 %v560, 0.5
        %v689 = vadd.f32 %v561, 0.5
        %v690 = vadd.f32 %v562, 0.5
        %v691 = vadd.f32 %v563, 0.5
        %v692 = vadd.f32 %v564, 0.5
        %v693 = vadd.f32 %v565, 0.5
        %v694 = vadd.f32 %v566, 0.5
        %v695 = vadd.f32 %v567, 0.5
        %v696 = vadd.f32 %v568, 0.5
        %v697 = vadd.f32 %v569, 0.5
        %v698 = vadd.f32 %v570, 0.5
        %v699 = vadd.f32 %v571, 0.5
        %v700 = vadd.f32 %v572, 0.5
        %v701 = vadd.f32 %v573, 0.5
        %v702 = vadd.f32 %v574, 0.5
        %v703 = vadd.f32 %v575, 0.5
        %v704 = vadd.f32 %v576, 0.5
        %v705 = vadd.f32 %v577, 0.5
        %v706 = vadd.f32 %v578, 0.5
        %v707 = vadd.f32 %v579, 0.5
        %v708 = vadd.f32 %v580, 0.5
        %v709 = vadd.f32 %v581, 0.5
        %v710 = vadd.f32 %v582, 0.5
        %v711 = vadd.f32 %v583, 0.5
        %v712 = vadd.f32 %v584, 0.5
        %v713 = vadd.f32 %v585, 0.5
        %v714 = vadd.f32 %v586, 0.5
        %v715 = vadd.f32 %v587, 0.5
        %v716 = vadd.f32 %v588, 0.5
        %v717 = vadd.f32 %v589, 0.5
        %v718 = vadd.f32 %v590, 0.5
        %v719 = vadd.f32 %v591, 0.5
        %v720 = vadd.f32 %v592, 0.5
        %v721 = vadd.f32 %v593, 0.5
        %v722 = vadd.f32 %v594, 0.5
        %v723 = vadd.f32 %v595, 0.5
        %v724 = vadd.f32 %v596, 0.5
        %v725 = vadd.f32 %v597, 0.5
        %v726 = vadd.f32 %v598, 0.5
        %v727 = vadd.f32 %v599, 0.5
        %v728 = vadd.f32 %v600, 0.5
        %v729 = vadd.f32 %v601, 0.5
        %v730 = vadd.f32 %v602, 0.5
        %v731 = vadd.f32 %v603, 0.5
        %v732 = vadd.f32 %v604, 0.5
        %v733 = vadd.f32 %v605, 0.5
        %v734 = vadd.f32 %v606, 0.5
        %v735 = vadd.f32 %v607, 0.5
        %v736 = vadd.f32 %v608, 0.5
        %v737 = vadd.f32 %v609, 0.5
        %v738 = vadd.f32 %v610, 0.5
        %v739 = vadd.f32 %v611, 0.5
        %v740 = vadd.f32 %v612, 0.5
        %v741 = vadd.f32 %v613, 0.5
        %v742 = vadd.f32 %v614, 0.5
        %v743 = vadd.f32 %v615, 0.5
        %v744 = vadd.f32 %v616, 0.5
        %v745 = vadd.f32 %v617, 0.5
        %v746 = vadd.f32 %v618, 0.5
        %v747 = vadd.f32 %v619, 0.5
        %v748 = vadd.f32 %v620, 0.5
        %v749 = vadd.f32 %v621, 0.5
        %v750 = vadd.f32 %v622, 0.5
        %v751 = vadd.f32 %v623, 0.5
        %v752 = vadd.f32 %v624, 0.5
        %v753 = vadd.f32 %v625, 0.5
        %v754 = vadd.f32 %v626, 0.5
        %v755 = vadd.f32 %v627, 0.5
        %v756 = vadd.f32 %v628, 0.5
        %v757 = vadd.f32 %v629, 0.5
        %v758 = vadd.f32 %v630, 0.5
        %v759 = vadd.f32 %v631, 0.5
        %v760 = vadd.f32 %v632, 0.5
        %v761 = vadd.f32 %v633, 0.5
        %v762 = vadd.f32 %v634, 0.5
        %v763 = vadd.f32 %v635, 0.5
        %v764 = vadd.f32 %v636, 0.5
        %v765 = vadd.f32 %v637, 0.5
        %v766 = vadd.f32 %v638, 0.5
        %v767 = vadd.f32 %v639, 0.5
        %v768 = vadd.f32 %v640, 0.5
        %v769 = vadd.f32 %v641, 0.5
        %v770 = vadd.f32 %v642, 0.5
        %v771 = vadd.f32 %v643, 0.5
        %v772 = vadd.f32 %v644, 0.5
        %v773 = vadd.f32 %v645, 0.5
        %v774 = vadd.f32 %v646, 0.5
        %v775 = vadd.f32 %v647, 0.5
        %v776 = vadd.f32 %v648, %v649
        %v777 = vadd.f32 %v776, %v650
        %v778 = vadd.f32 %v777, %v651
        %v779 = vadd.f32 %v778, %v652
        %v780 = vadd.f32 %v779, %v653
        %v781 = vadd.f32 %v780, %v654
        %v782 = vadd.f32 %v781, %v655
        %v783 = vadd.f32 %v782, %v656
        %v784 = vadd.f32 %v783, %v657
        %v785 = vadd.f32 %v784, %v658
        %v786 = vadd.f32 %v785, %v659
        %v787 = vadd.f32 %v786, %v660
        %v788 = vadd.f32 %v787, %v661
        %v789 = vadd.f32 %v788, %v662
        %v790 = vadd.f32 %v789, %v663
        %v791 = vadd.f32 %v790, %v664
        %v792 = vadd.f32 %v791, %v665
        %v793 = vadd.f32 %v792, %v666
        %v794 = vadd.f32 %v793, %v667
        %v795 = vadd.f32 %v794, %v668
        %v796 = vadd.f32 %v795, %v669
        %v797 = vadd.f32 %v796, %v670
        %v798 = vadd.f32 %v797, %v671
        %v799 = vadd.f32 %v798, %v672
        %v800 = vadd.f32 %v799, %v673
        %v801 = vadd.f32 %v800, %v674
        %v802 = vadd.f32 %v801, %v675
        %v803 = vadd.f32 %v802, %v676
        %v804 = vadd.f32 %v803, %v677
        %v805 = vadd.f32 %v804, %v678
        %v806 = vadd.f32 %v805, %v679
        %v807 = vadd.f32 %v806, %v680
        %v808 = vadd.f32 %v807, %v681
        %v809 = vadd.f32 %v808, %v682
        %v810 = vadd.f32 %v809, %v683
        %v811 = vadd.f32 %v810, %v684
        %v812 = vadd.f32 %v811, %v685
        %v813 = vadd.f32 %v812, %v686
        %v814 = vadd.f32 %v813, %v687
        %v815 = vadd.f32 %v814, %v688
        %v816 = vadd.f32 %v815, %v689
        %v817 = vadd.f32 %v816, %v690
        %v818 = vadd.f32 %v817, %v691
        %v819 = vadd.f32 %v818, %v692
        %v820 = vadd.f32 %v819, %v693
        %v821 = vadd.f32 %v820, %v694
        %v822 = vadd.f32 %v821, %v695
        %v823 = vadd.f32 %v822, %v696
        %v824 = vadd.f32 %v823, %v697
        %v825 = vadd.f32 %v824, %v698
        %v826 = vadd.f32 %v825, %v699
        %v827 = vadd.f32 %v826, %v700
        %v828 = vadd.f32 %v827, %v701
        %v829 = vadd.f32 %v828, %v702
        %v830 = vadd.f32 %v829, %v703
        %v831 = vadd.f32 %v830, %v704
        %v832 = vadd.f32 %v831, %v705
        %v833 = vadd.f32 %v832, %v706
        %v834 = vadd.f32 %v833, %v707
        %v835 = vadd.f32 %v834, %v708
        %v836 = vadd.f32 %v835, %v709
        %v837 = vadd.f32 %v836, %v710
        %v838 = vadd.f32 %v837, %v711
        %v839 = vadd.f32 %v838, %v712
        %v840 = vadd.f32 %v839, %v713
        %v841 = vadd.f32 %v840, %v714
        %v842 = vadd.f32 %v841, %v715
        %v843 = vadd.f32 %v842, %v716
        %v844 = vadd.f32 %v843, %v717
        %v845 = vadd.f32 %v844, %v718
        %v846 = vadd.f32 %v845, %v719
        %v847 = vadd.f32 %v846, %v720
        %v848 = vadd.f32 %v847, %v721
        %v849 = vadd.f32 %v848, %v722
        %v850 = vadd.f32 %v849, %v723
        %v851 = vadd.f32 %v850, %v724
        %v852 = vadd.f32 %v851, %v725
        %v853 = vadd.f32 %v852, %v726
        %v854 = vadd.f32 %v853, %v727
        %v855 = vadd.f32 %v854, %v728
        %v856 = vadd.f32 %v855, %v729
        %v857 = vadd.f32 %v856, %v730
        %v858 = vadd.f32 %v857, %v731
        %v859 = vadd.f32 %v858, %v732
        %v860 = vadd.f32 %v859, %v733
        %v861 = vadd.f32 %v860, %v734
        %v862 = vadd.f32 %v861, %v735
        %v863 = vadd.f32 %v862, %v736
        %v864 = vadd.f32 %v863, %v737
        %v865 = vadd.f32 %v864, %v738
        %v866 = vadd.f32 %v865, %v739
        %v867 = vadd.f32 %v866, %v740
        %v868 = vadd.f32 %v867, %v741
        %v869 = vadd.f32 %v868, %v742
        %v870 = vadd.f32 %v869, %v743
        %v871 = vadd.f32 %v870, %v744
        %v872 = vadd.f32 %v871, %v745
        %v873 = vadd.f32 %v872, %v746
        %v874 = vadd.f32 %v873, %v747
        %v875 = vadd.f32 %v874, %v748
        %v876 = vadd.f32 %v875, %v749
        %v877 = vadd.f32 %v876, %v750
        %v878 = vadd.f32 %v877, %v751
        %v879 = vadd.f32 %v878, %v752
        %v880 = vadd.f32 %v879, %v753
        %v881 = vadd.f32 %v880, %v754
        %v882 = vadd.f32 %v881, %v755
        %v883 = vadd.f32 %v882, %v756
        %v884 = vadd.f32 %v883, %v757
        %v885 = vadd.f32 %v884, %v758
        %v886 = vadd.f32 %v885, %v759
        %v887 = vadd.f32 %v886, %v760
        %v888 = vadd.f32 %v887, %v761
        %v889 = vadd.f32 %v888, %v762
        %v890 = vadd.f32 %v889, %v763
        %v891 = vadd.f32 %v890, %v764
        %v892 = vadd.f32 %v891, %v765
        %v893 = vadd.f32 %v892, %v766
        %v894 = vadd.f32 %v893, %v767
        %v895 = vadd.f32 %v894, %v768
        %v896 = vadd.f32 %v895, %v769
        %v897 = vadd.f32 %v896, %v770
        %v898 = vadd.f32 %v897, %v771
        %v899 = vadd.f32 %v898, %v772
        %v900 = vadd.f32 %v899, %v773
        %v901 = vadd.f32 %v900, %v774
        %v902 = vadd.f32 %v901, %v775
        %903 = vst [vmem:[%s134] sm:$0xff] %v902
        %s904 = sand.u32 %s52, 1
        %s905 = scalar_lea.sflag [#allocation4], %s904
        %s906 = sand.u32 %s52, 1
        %s907 = smul.addr %s906, 8
        %s908 = scalar_lea.vmem [#allocation5], %s907
        // Predicated region
        $region29: #{tpu_custom_call.1} parent=23 // pred_check
          %p909 = pneg %p62
        $region30: #{tpu_custom_call.1} parent=23 // pred_check_branch
          %911 = sbr.rel (%p909) target = $region32
        $region31: #{tpu_custom_call.1} parent=23 // pred_region
          %s913 = ssub.s32 128, 128
          %914 = vsyncadd %s905, %s913
          %s915 = smul.addr %s18, 128
          %s916 = scalar_lea.hbm %s1, %s915
          %s918 = sshll.u32 %s908, 4
          %s919 = int_to_ptr.vmem [resolvable:$true] %s918
          %921 = dma.vmem_to_hbm [thread:$0]  %s919, 128, %s916, %s905
        $region32: #{tpu_custom_call.1} parent=23 // pred_fallthru
          _
      $region24: #{tpu_custom_call.1} parent=5 // pred_fallthru
        _
      %p922 = scmp.le.s32.totalorder 2, %s13
      // Predicated region
      $region33: #{tpu_custom_call.1} parent=5 // pred_check
        %p923 = pneg %p922
      $region34: #{tpu_custom_call.1} parent=5 // pred_check_branch
        %925 = sbr.rel (%p923) target = $region36
      $region35: #{tpu_custom_call.1} parent=5 // pred_region
        %s926 = ssub.s32 %s13, 2
        // Predicated region
        $region37: #{tpu_custom_call.1} parent=35 // pred_check
          %p927 = pneg %p68
        $region38: #{tpu_custom_call.1} parent=35 // pred_check_branch
          %929 = sbr.rel (%p927) target = $region40
        $region39: #{tpu_custom_call.1} parent=35 // pred_region
          %s930 = sand.u32 %s53, 1
          %s931 = scalar_lea.sflag [#allocation4], %s930
          %s932 = sand.u32 %s53, 1
          %s933 = smul.addr %s932, 8
          %s934 = scalar_lea.vmem [#allocation5], %s933
          %935 = dma.done %s931, 128
        $region40: #{tpu_custom_call.1} parent=35 // pred_fallthru
          _
      $region36: #{tpu_custom_call.1} parent=5 // pred_fallthru
        _
    $region6: #{tpu_custom_call.1} parent=1 // loop_footer
      %s17 = sadd.s32 1, %s13
    $region7: #{tpu_custom_call.1} parent=1 // loop_footer_branch
      %12 = sbr.rel target = $region3
    $region8: #{tpu_custom_call.1} parent=1 // loop_exit
      _
    %936 = vsyncpa [#allocation3], 1
    %s937 = scalar_lea.sflag [#allocation3], 1
    %938 = vsyncpa %s937, 1
    %939 = vsyncpa [#allocation4], 1
    %s940 = scalar_lea.sflag [#allocation4], 1
    %941 = vsyncpa %s940, 1

</llo_original>
